<compile_context>
chip_gen: v5e
topology: v5e:2x2
jax: 0.10.0
libtpu: 0.0.40
codegen_flags: <defaults>
</compile_context>

<pallas_src>
import numpy as np
import jax
import jax.numpy as jnp
from jax import lax
from jax.experimental import pallas as pl
from jax.experimental.pallas import tpu as pltpu


def _shrinker_kernel(p_ref, w_ref, s_ref, b_ref, o_ref):
    """Fused conv(2x2, stride 2) + BatchNorm + ReLU for one (batch, HW-tile) block.

    p_ref : (1, K, THW)    bf16  space-to-depth patches (K = 4*Cin)
    w_ref : (Cout, K)      bf16  conv weight, (dh, dw, ci) flattened into K
    s_ref : (Cout, 1)      f32   folded BN scale   gamma / sqrt(var + eps)
    b_ref : (Cout, 1)      f32   folded bias       (conv_b - mean) * scale + beta
    o_ref : (1, Cout, THW) f32   output, flat NCHW layout
    """
    acc = jnp.dot(w_ref[...], p_ref[0],
                  preferred_element_type=jnp.float32)          # (Cout, THW) f32, MXU
    y = acc * s_ref[...] + b_ref[...]                          # per-channel BN, f32 VPU
    o_ref[0] = jnp.maximum(y, 0.0).astype(o_ref.dtype)         # ReLU + lane-dense store


def _pick_hw_tile(hw):
    """Largest HW tile <= 2048 that divides hw (multiple of 128 when possible)."""
    if hw <= 2048:
        return hw
    for t in range(2048, 127, -128):
        if hw % t == 0:
            return t
    return hw


def shrinker_forward(x_nchw, w_oihw, conv_bias, gamma, beta,
                     running_mean, running_var, eps=1e-5):
    """Forward of Shrinker: Conv2d(2F->2F, k=2, s=2) -> BatchNorm2d (eval) -> ReLU."""
    n, c, h, w = x_nchw.shape
    cout, cin, kh, kw = w_oihw.shape
    assert cin == c and kh == 2 and kw == 2
    assert h % 2 == 0 and w % 2 == 0
    ho, wo = h // 2, w // 2
    hw = ho * wo
    k = 4 * cin

    # Space-to-depth (one fused XLA reshape/transpose/reshape):
    # patches[n, dh*2C + dw*C + ci, i*Wo + j] = x[n, ci, 2i+dh, 2j+dw]
    patches = (x_nchw.reshape(n, c, ho, 2, wo, 2)
               .transpose(0, 3, 5, 1, 2, 4)
               .reshape(n, k, hw)
               .astype(jnp.bfloat16))

    # Weight as (Cout, K) with the same (dh, dw, ci) ordering as the patches.
    w_mat = (w_oihw.transpose(0, 2, 3, 1)      # (Cout, 2, 2, Cin)
             .reshape(cout, k)
             .astype(jnp.bfloat16))

    # Fold BatchNorm (inference mode, running stats) + conv bias into scale/bias.
    # TODO(synk): training-mode BatchNorm (batch statistics) not implemented here.
    scale = (gamma / jnp.sqrt(running_var + eps)).astype(jnp.float32)
    fused_bias = ((conv_bias - running_mean) * scale + beta).astype(jnp.float32)
    scale2 = scale.reshape(cout, 1)
    fused_bias2 = fused_bias.reshape(cout, 1)

    thw = _pick_hw_tile(hw)

    out_flat = pl.pallas_call(
        _shrinker_kernel,
        out_shape=jax.ShapeDtypeStruct((n, cout, hw), x_nchw.dtype),
        grid=(n, hw // thw),
        in_specs=[
            pl.BlockSpec((1, k, thw), lambda b, t: (b, 0, t)),
            pl.BlockSpec((cout, k), lambda b, t: (0, 0)),
            pl.BlockSpec((cout, 1), lambda b, t: (0, 0)),
            pl.BlockSpec((cout, 1), lambda b, t: (0, 0)),
        ],
        out_specs=pl.BlockSpec((1, cout, thw), lambda b, t: (b, 0, t)),
        compiler_params=pltpu.CompilerParams(
            dimension_semantics=("parallel", "parallel")),
    )(patches, w_mat, scale2, fused_bias2)

    return out_flat.reshape(n, cout, ho, wo)   # free reshape: already NCHW order


def _reference(x, w_oihw, conv_bias, gamma, beta, mean, var, eps=1e-5):
    """Independent XLA reference: conv -> BN(eval) -> ReLU, all f32."""
    y = lax.conv_general_dilated(
        x, w_oihw, window_strides=(2, 2), padding="VALID",
        dimension_numbers=("NCHW", "OIHW", "NCHW"),
        precision=lax.Precision.HIGHEST)
    y = y + conv_bias[None, :, None, None]
    y = (y - mean[None, :, None, None]) * (
        gamma[None, :, None, None] / jnp.sqrt(var[None, :, None, None] + eps))
    y = y + beta[None, :, None, None]
    return jnp.maximum(y, 0.0)


if __name__ == "__main__":
    feature = 16
    channels = 2 * feature                      # Conv2d(feature*2, feature*2)
    batch, h, w = 2, 32, 32

    key = jax.random.PRNGKey(0)
    kx, kw_, kb, kg, kbe, km, kv = jax.random.split(key, 7)
    x = jax.random.normal(kx, (batch, channels, h, w), dtype=jnp.float32)

    fan_in = channels * 2 * 2
    bound = 1.0 / np.sqrt(fan_in)
    w_oihw = jax.random.uniform(kw_, (channels, channels, 2, 2),
                                jnp.float32, -bound, bound)
    conv_bias = jax.random.uniform(kb, (channels,), jnp.float32, -bound, bound)
    gamma = jax.random.uniform(kg, (channels,), jnp.float32, 0.5, 1.5)
    beta = jax.random.uniform(kbe, (channels,), jnp.float32, -0.5, 0.5)
    running_mean = jax.random.uniform(km, (channels,), jnp.float32, -0.5, 0.5)
    running_var = jax.random.uniform(kv, (channels,), jnp.float32, 0.5, 1.5)

    y = shrinker_forward(x, w_oihw, conv_bias, gamma, beta,
                         running_mean, running_var)
    y = jax.block_until_ready(y)
    assert y.shape == (batch, channels, h // 2, w // 2), y.shape

    # Compare against an f32 XLA conv on the same bf16-quantized operands (the
    # kernel feeds the MXU in bf16 with f32 accumulation).
    x_q = x.astype(jnp.bfloat16).astype(jnp.float32)
    w_q = w_oihw.astype(jnp.bfloat16).astype(jnp.float32)
    y_ref = _reference(x_q, w_q, conv_bias, gamma, beta,
                       running_mean, running_var)
    np.testing.assert_allclose(np.asarray(y), np.asarray(y_ref),
                               rtol=2e-3, atol=2e-3)

    print("KERNEL_OK")
</pallas_src>

<mosaic_0001>
module attributes {stable_mosaic.version = 11 : i64} {
  func.func @_shrinker_kernel(%arg0: i32, %arg1: i32, %arg2: memref<1x128x256xbf16, #tpu.memory_space<vmem>>, %arg3: memref<32x128xbf16, #tpu.memory_space<vmem>>, %arg4: memref<32x1xf32, #tpu.memory_space<vmem>>, %arg5: memref<32x1xf32, #tpu.memory_space<vmem>>, %arg6: memref<1x32x256xf32, #tpu.memory_space<vmem>>) attributes {dimension_semantics = [#tpu.dimension_semantics<parallel>, #tpu.dimension_semantics<parallel>], iteration_bounds = array<i64: 2, 1>, scalar_prefetch = 0 : i64, scratch_operands = 0 : i64, tpu.core_type = #tpu.core_type<tc>, window_params = [{transform_indices = @transform_0, window_bounds = array<i64: 1, 128, 256>}, {pipeline_mode = #tpu.pipeline_mode<synchronous>, transform_indices = @transform_1, window_bounds = array<i64: 32, 128>}, {pipeline_mode = #tpu.pipeline_mode<synchronous>, transform_indices = @transform_2, window_bounds = array<i64: 32, 1>}, {pipeline_mode = #tpu.pipeline_mode<synchronous>, transform_indices = @transform_3, window_bounds = array<i64: 32, 1>}, {transform_indices = @transform_4, window_bounds = array<i64: 1, 32, 256>}]} {
    %c0 = arith.constant 0 : index
    %c0_0 = arith.constant 0 : index
    %0 = vector.load %arg3[%c0, %c0_0] : memref<32x128xbf16, #tpu.memory_space<vmem>>, vector<32x128xbf16>
    %c0_1 = arith.constant 0 : index
    %c0_2 = arith.constant 0 : index
    %c0_3 = arith.constant 0 : index
    %1 = vector.load %arg2[%c0_1, %c0_2, %c0_3] : memref<1x128x256xbf16, #tpu.memory_space<vmem>>, vector<1x128x256xbf16>
    %2 = vector.shape_cast %1 : vector<1x128x256xbf16> to vector<128x256xbf16>
    %cst = arith.constant dense<0.000000e+00> : vector<32x256xf32>
    %3 = tpu.matmul %0, %2, %cst {dimension_numbers = #tpu.dot_dimension_numbers<[1], [0], [0], [1], [0, 0, 1, 1], [], []>} : vector<32x128xbf16>, vector<128x256xbf16>, vector<32x256xf32> -> vector<32x256xf32>
    %c0_4 = arith.constant 0 : index
    %c0_5 = arith.constant 0 : index
    %4 = vector.load %arg4[%c0_4, %c0_5] : memref<32x1xf32, #tpu.memory_space<vmem>>, vector<32x1xf32>
    %5 = vector.broadcast %4 : vector<32x1xf32> to vector<32x256xf32>
    %6 = arith.mulf %3, %5 : vector<32x256xf32>
    %c0_6 = arith.constant 0 : index
    %c0_7 = arith.constant 0 : index
    %7 = vector.load %arg5[%c0_6, %c0_7] : memref<32x1xf32, #tpu.memory_space<vmem>>, vector<32x1xf32>
    %8 = vector.broadcast %7 : vector<32x1xf32> to vector<32x256xf32>
    %9 = arith.addf %6, %8 : vector<32x256xf32>
    %cst_8 = arith.constant 0.000000e+00 : f32
    %10 = vector.broadcast %cst_8 : f32 to vector<32x256xf32>
    %11 = arith.maximumf %9, %10 : vector<32x256xf32>
    %c0_9 = arith.constant 0 : index
    %c0_10 = arith.constant 0 : index
    %c0_11 = arith.constant 0 : index
    %12 = vector.load %arg6[%c0_9, %c0_10, %c0_11] : memref<1x32x256xf32, #tpu.memory_space<vmem>>, vector<1x32x256xf32>
    %13 = vector.shape_cast %12 : vector<1x32x256xf32> to vector<32x256xf32>
    %14 = vector.shape_cast %11 : vector<32x256xf32> to vector<1x32x256xf32>
    tpu.vector_store %arg6[%c0_9, %c0_10, %c0_11], %14 {strides = array<i32>} : memref<1x32x256xf32, #tpu.memory_space<vmem>>, vector<1x32x256xf32>,
    return
  }
  func.func @transform_0(%arg0: i32, %arg1: i32) -> (i32, i32, i32) {
    %c0_i32 = arith.constant 0 : i32
    %c0_i32_0 = arith.constant 0 : i32
    return %arg0, %c0_i32, %arg1 : i32, i32, i32
  }
  func.func @transform_1(%arg0: i32, %arg1: i32) -> (i32, i32) {
    %c0_i32 = arith.constant 0 : i32
    %c0_i32_0 = arith.constant 0 : i32
    %c0_i32_1 = arith.constant 0 : i32
    return %c0_i32, %c0_i32_0 : i32, i32
  }
  func.func @transform_2(%arg0: i32, %arg1: i32) -> (i32, i32) {
    %c0_i32 = arith.constant 0 : i32
    %c0_i32_0 = arith.constant 0 : i32
    %c0_i32_1 = arith.constant 0 : i32
    return %c0_i32, %c0_i32_0 : i32, i32
  }
  func.func @transform_3(%arg0: i32, %arg1: i32) -> (i32, i32) {
    %c0_i32 = arith.constant 0 : i32
    %c0_i32_0 = arith.constant 0 : i32
    %c0_i32_1 = arith.constant 0 : i32
    return %c0_i32, %c0_i32_0 : i32, i32
  }
  func.func @transform_4(%arg0: i32, %arg1: i32) -> (i32, i32, i32) {
    %c0_i32 = arith.constant 0 : i32
    %c0_i32_0 = arith.constant 0 : i32
    return %arg0, %c0_i32, %arg1 : i32, i32, i32
  }
}

</mosaic_0001>

<llo_original>
// kernel: tpu_custom_call.1
$region0: #{tpu_custom_call.1}
  #allocation0 [shape = 'u32[]', space=smem, size = 0x4, offset = 0x4, fixed_abs, tag = 'smem constant byte address 0x4 - core index']
  #allocation1 [shape = 'u32[72,128]{1,0:T(1,128)}', space=vmem, size = 0x9000, scoped, tag = 'internal scratch']
  %s0 = inlined_call_operand.hbm [shape: bf16[2,128,256], index: 0, kind: input, shape index: {}]
  %s1 = inlined_call_operand.vmem [shape: bf16[32,128], index: 1, kind: input, shape index: {}]
  %s2 = inlined_call_operand.vmem [shape: f32[32,1], index: 2, kind: input, shape index: {}]
  %s3 = inlined_call_operand.vmem [shape: f32[32,1], index: 3, kind: input, shape index: {}]
  %s4 = inlined_call_operand.hbm [shape: f32[2,32,256], index: 4, kind: output, shape index: {}]
  %s5 = sld [smem:[#allocation0]]
  $region53: #{tpu_custom_call.1} parent=0
    _
  %s7 = ssub.s32 1, %s5
  %s8 = scalar_select 0, %s7, %s5
  $region1: #{tpu_custom_call.1} parent=0
    #allocation2 [shape = 'u8[131072]{0}', space=vmem, size = 0x20000, scoped, tag = 'input window, operand 0']
    #allocation3 [shape = 's32[2]{0}', space=sflag, size = 0x8, scoped, tag = 'scoped memory for tpu_custom_call.1']
    #allocation4 [shape = 's32[2]{0}', space=sflag, size = 0x8, scoped, tag = 'scoped memory for tpu_custom_call.1']
    #allocation5 [shape = 'u8[65536]{0}', space=vmem, size = 0x10000, scoped, tag = 'output window, operand 0']
    %9 = vsyncpa [#allocation3], 0
    %s10 = scalar_lea.sflag [#allocation3], 1
    %11 = vsyncpa %s10, 0
    %12 = vsyncpa [#allocation4], 0
    %s13 = scalar_lea.sflag [#allocation4], 1
    %14 = vsyncpa %s13, 0
    loop: start=0, step=1, limit=4
    $region2: #{tpu_custom_call.1} parent=1 // loop_pre_header
      _
    $region3: #{tpu_custom_call.1} parent=1 // loop_header
      %s16 = sphi 0, %s20
      %p17 = scmp.ge.s32.totalorder %s16, 4
      %s23 = sphi 0, %s35
      %s24 = sphi 0, %s31
      %s25 = sphi 0, %s23
      %s26 = sphi 0, %s24
      %s27 = sphi 0, %s25
      %s28 = sphi 0, %s26
      %s40 = sphi 0, %s42
      %s43 = sphi 0, %s40
      %s44 = sphi 0, %s43
      %s60 = sphi 0, %s44
      %s64 = sphi 0, %s64
      %s66 = sphi 0, %s64
      %s67 = sphi 0, %s66
      %s81 = sphi 0, %s67
      %s85 = sphi 0, %s85
      %s87 = sphi 0, %s85
      %s88 = sphi 0, %s87
      %s102 = sphi 0, %s88
      %s106 = sphi 0, %s106
      %s108 = sphi 0, %s106
      %s109 = sphi 0, %s108
      %s123 = sphi 0, %s109
      %s131 = sphi 0, %s133
      %s134 = sphi 0, %s131
      %s135 = sphi 0, %s134
      %s151 = sphi 0, %s135
    $region4: #{tpu_custom_call.1} parent=1 // loop_header_branch
      %19 = sbr.rel (%p17) target = $region8
    $region5: #{tpu_custom_call.1} parent=1 // loop_body
      %s21 = ssub.s32 %s16, 1
      %s22 = ssub.s32 %s16, 2
      %s29 = sadd.s32 1, %s24
      %p30 = scmp.ge.s32.totalorder %s29, 1
      %s31 = scalar_select %p30, 0, %s29
      %s32 = sadd.s32 1, %s23
      %s33 = scalar_select %p30, %s32, %s23
      %p34 = scmp.ge.s32.totalorder %s33, 2
      %s35 = scalar_select %p34, 0, %s33
      %s36 = ssub.s32 %s23, %s35
      %s37 = ssub.s32 %s24, %s31
      %s38 = sor.u32 %s36, %s37
      %p39 = scmp.eq.s32.totalorder %s38, 0
      %s41 = sadd.s32 %s40, 1
      %s42 = scalar_select %p39, %s40, %s41
      %p45 = pneg %p39
      %p46 = scmp.eq.s32.totalorder %s16, 1
      %p47 = por %p45, %p46
      %p48 = scmp.ne.s32.totalorder %s40, %s43
      %p49 = scmp.eq.s32.totalorder %s16, 0
      %p50 = por %p48, %p49
      %p51 = scmp.ne.s32.totalorder %s40, %s43
      %p52 = scmp.eq.s32.totalorder %s21, 1
      %p53 = por %p51, %p52
      %p54 = scmp.ne.s32.totalorder %s43, %s44
      %p55 = scmp.eq.s32.totalorder %s21, 0
      %p56 = por %p54, %p55
      %p57 = scmp.ne.s32.totalorder %s43, %s44
      %p58 = scmp.eq.s32.totalorder %s22, 1
      %p59 = por %p57, %p58
      %p61 = scmp.ne.s32.totalorder %s44, %s60
      %p62 = scmp.eq.s32.totalorder %s22, 0
      %p63 = por %p61, %p62
      %s65 = sadd.s32 %s64, 1
      %p68 = scmp.eq.s32.totalorder %s16, 1
      %p69 = scmp.ne.s32.totalorder %s64, %s66
      %p70 = scmp.eq.s32.totalorder %s16, 0
      %p71 = por %p69, %p70
      %p72 = scmp.ne.s32.totalorder %s64, %s66
      %p73 = scmp.eq.s32.totalorder %s21, 1
      %p74 = por %p72, %p73
      %p75 = scmp.ne.s32.totalorder %s66, %s67
      %p76 = scmp.eq.s32.totalorder %s21, 0
      %p77 = por %p75, %p76
      %p78 = scmp.ne.s32.totalorder %s66, %s67
      %p79 = scmp.eq.s32.totalorder %s22, 1
      %p80 = por %p78, %p79
      %p82 = scmp.ne.s32.totalorder %s67, %s81
      %p83 = scmp.eq.s32.totalorder %s22, 0
      %p84 = por %p82, %p83
      %s86 = sadd.s32 %s85, 1
      %p89 = scmp.eq.s32.totalorder %s16, 1
      %p90 = scmp.ne.s32.totalorder %s85, %s87
      %p91 = scmp.eq.s32.totalorder %s16, 0
      %p92 = por %p90, %p91
      %p93 = scmp.ne.s32.totalorder %s85, %s87
      %p94 = scmp.eq.s32.totalorder %s21, 1
      %p95 = por %p93, %p94
      %p96 = scmp.ne.s32.totalorder %s87, %s88
      %p97 = scmp.eq.s32.totalorder %s21, 0
      %p98 = por %p96, %p97
      %p99 = scmp.ne.s32.totalorder %s87, %s88
      %p100 = scmp.eq.s32.totalorder %s22, 1
      %p101 = por %p99, %p100
      %p103 = scmp.ne.s32.totalorder %s88, %s102
      %p104 = scmp.eq.s32.totalorder %s22, 0
      %p105 = por %p103, %p104
      %s107 = sadd.s32 %s106, 1
      %p110 = scmp.eq.s32.totalorder %s16, 1
      %p111 = scmp.ne.s32.totalorder %s106, %s108
      %p112 = scmp.eq.s32.totalorder %s16, 0
      %p113 = por %p111, %p112
      %p114 = scmp.ne.s32.totalorder %s106, %s108
      %p115 = scmp.eq.s32.totalorder %s21, 1
      %p116 = por %p114, %p115
      %p117 = scmp.ne.s32.totalorder %s108, %s109
      %p118 = scmp.eq.s32.totalorder %s21, 0
      %p119 = por %p117, %p118
      %p120 = scmp.ne.s32.totalorder %s108, %s109
      %p121 = scmp.eq.s32.totalorder %s22, 1
      %p122 = por %p120, %p121
      %p124 = scmp.ne.s32.totalorder %s109, %s123
      %p125 = scmp.eq.s32.totalorder %s22, 0
      %p126 = por %p124, %p125
      %s127 = ssub.s32 %s23, %s35
      %s128 = ssub.s32 %s24, %s31
      %s129 = sor.u32 %s127, %s128
      %p130 = scmp.eq.s32.totalorder %s129, 0
      %s132 = sadd.s32 %s131, 1
      %s133 = scalar_select %p130, %s131, %s132
      %p136 = pneg %p130
      %p137 = scmp.eq.s32.totalorder %s16, 1
      %p138 = por %p136, %p137
      %p139 = scmp.ne.s32.totalorder %s131, %s134
      %p140 = scmp.eq.s32.totalorder %s16, 0
      %p141 = por %p139, %p140
      %p142 = scmp.ne.s32.totalorder %s131, %s134
      %p143 = scmp.eq.s32.totalorder %s21, 1
      %p144 = por %p142, %p143
      %p145 = scmp.ne.s32.totalorder %s134, %s135
      %p146 = scmp.eq.s32.totalorder %s21, 0
      %p147 = por %p145, %p146
      %p148 = scmp.ne.s32.totalorder %s134, %s135
      %p149 = scmp.eq.s32.totalorder %s22, 1
      %p150 = por %p148, %p149
      %p152 = scmp.ne.s32.totalorder %s135, %s151
      %p153 = scmp.eq.s32.totalorder %s22, 0
      %p154 = por %p152, %p153
      %p155 = scmp.le.s32.totalorder 1, %s16
      %p156 = scmp.lt.s32.totalorder %s16, 3
      %p157 = pnand %p155, %p156
      %p158 = pneg %p157
      // Predicated region
      $region9: #{tpu_custom_call.1} parent=5 // pred_check
        _
      $region10: #{tpu_custom_call.1} parent=5 // pred_check_branch
        %160 = sbr.rel (%p157) target = $region12
      $region11: #{tpu_custom_call.1} parent=5 // pred_region
        %s161 = ssub.s32 %s16, 1
        // Predicated region
        $region13: #{tpu_custom_call.1} parent=11 // pred_check
          %p162 = pneg %p77
        $region14: #{tpu_custom_call.1} parent=11 // pred_check_branch
          %164 = sbr.rel (%p162) target = $region16
        $region15: #{tpu_custom_call.1} parent=11 // pred_region
          _
        $region16: #{tpu_custom_call.1} parent=11 // pred_fallthru
          _
        // Predicated region
        $region17: #{tpu_custom_call.1} parent=11 // pred_check
          %p165 = pneg %p98
        $region18: #{tpu_custom_call.1} parent=11 // pred_check_branch
          %167 = sbr.rel (%p165) target = $region20
        $region19: #{tpu_custom_call.1} parent=11 // pred_region
          _
        $region20: #{tpu_custom_call.1} parent=11 // pred_fallthru
          _
        // Predicated region
        $region21: #{tpu_custom_call.1} parent=11 // pred_check
          %p168 = pneg %p119
        $region22: #{tpu_custom_call.1} parent=11 // pred_check_branch
          %170 = sbr.rel (%p168) target = $region24
        $region23: #{tpu_custom_call.1} parent=11 // pred_region
          _
        $region24: #{tpu_custom_call.1} parent=11 // pred_fallthru
          _
      $region12: #{tpu_custom_call.1} parent=5 // pred_fallthru
        _
      %p171 = scmp.lt.s32.totalorder %s16, 2
      // Predicated region
      $region25: #{tpu_custom_call.1} parent=5 // pred_check
        %p172 = pneg %p171
      $region26: #{tpu_custom_call.1} parent=5 // pred_check_branch
        %174 = sbr.rel (%p172) target = $region28
      $region27: #{tpu_custom_call.1} parent=5 // pred_region
        // Predicated region
        $region29: #{tpu_custom_call.1} parent=27 // pred_check
          %p175 = pneg %p50
        $region30: #{tpu_custom_call.1} parent=27 // pred_check_branch
          %177 = sbr.rel (%p175) target = $region32
        $region31: #{tpu_custom_call.1} parent=27 // pred_region
          %s178 = sand.u32 %s40, 1
          %s179 = scalar_lea.sflag [#allocation3], %s178
          %s180 = sand.u32 %s40, 1
          %s181 = smul.addr %s180, 128
          %s182 = scalar_lea.vmem [#allocation2], %s181
          %s183 = smul.u32 2, %s24
          %185 = vsyncadd %s179, 0
          %s186 = smul.addr %s23, 32
          %s187 = sadd.s32 %s183, %s186
          %s188 = smul.addr %s187, 4
          %s189 = scalar_lea.hbm %s0, %s188
          %s190 = sshll.u32 %s189, 4
          %s191 = int_to_ptr.hbm [resolvable:$true] %s190
          %s192 = sshll.u32 %s182, 4
          %s193 = int_to_ptr.vmem [resolvable:$true] %s192
          %198 = dma.hbm_to_vmem [thread:$0]  %s191, 2048, %s193, %s179, 128, 128, 8
        $region32: #{tpu_custom_call.1} parent=27 // pred_fallthru
          _
      $region28: #{tpu_custom_call.1} parent=5 // pred_fallthru
        _
      %p199 = scmp.le.s32.totalorder 1, %s16
      %p200 = scmp.lt.s32.totalorder %s16, 3
      %p201 = pnand %p199, %p200
      %p202 = pneg %p201
      // Predicated region
      $region33: #{tpu_custom_call.1} parent=5 // pred_check
        _
      $region34: #{tpu_custom_call.1} parent=5 // pred_check_branch
        %204 = sbr.rel (%p201) target = $region36
      $region35: #{tpu_custom_call.1} parent=5 // pred_region
        %s205 = ssub.s32 %s16, 1
        %s206 = sand.u32 %s43, 1
        %s207 = scalar_lea.sflag [#allocation3], %s206
        %s208 = sand.u32 %s43, 1
        %s209 = smul.addr %s208, 128
        %s210 = scalar_lea.vmem [#allocation2], %s209
        // Predicated region
        $region37: #{tpu_custom_call.1} parent=35 // pred_check
          %p211 = pneg %p56
        $region38: #{tpu_custom_call.1} parent=35 // pred_check_branch
          %213 = sbr.rel (%p211) target = $region40
        $region39: #{tpu_custom_call.1} parent=35 // pred_region
          %215 = dma.done %s207, 2048
        $region40: #{tpu_custom_call.1} parent=35 // pred_fallthru
          _
        %s216 = sand.u32 %s43, 1
        %s217 = scalar_lea.sflag [#allocation3], %s216
        %s218 = sand.u32 %s43, 1
        %s219 = smul.addr %s218, 128
        %s220 = scalar_lea.vmem [#allocation2], %s219
        %p221 = pneg %p56
        %p222 = pneg %p53
        %p223 = pneg %p77
        %p224 = pneg %p74
        %p225 = pneg %p98
        %p226 = pneg %p95
        %p227 = pneg %p119
        %p228 = pneg %p116
        %p229 = pneg %p147
        %p230 = pneg %p144
        %s231 = sand.u32 %s134, 1
        %s232 = scalar_lea.sflag [#allocation4], %s231
        %s233 = sand.u32 %s134, 1
        %s234 = smul.addr %s233, 64
        %s235 = scalar_lea.vmem [#allocation5], %s234
        %s236 = smul.u32 2, %s26
        %s237 = smul.u32 2, %s26
        %v238 = vld [vmem:[%s1] sm:$0xf]
        %v239 = vld [vmem:[%s1 + $0x4] sm:$0xf]
        %v240 = vld [vmem:[%s1 + $0x8] sm:$0xf]
        %v241 = vld [vmem:[%s1 + $0xc] sm:$0xf]
        %v242 = vld [vmem:[%s210] sm:$0xff]
        %v243 = vld [vmem:[%s210 + $0x8] sm:$0xff]
        %v244 = vld [vmem:[%s210 + $0x10] sm:$0xff]
        %v245 = vld [vmem:[%s210 + $0x18] sm:$0xff]
        %v246 = vld [vmem:[%s210 + $0x20] sm:$0xff]
        %v247 = vld [vmem:[%s210 + $0x28] sm:$0xff]
        %v248 = vld [vmem:[%s210 + $0x30] sm:$0xff]
        %v249 = vld [vmem:[%s210 + $0x38] sm:$0xff]
        %v250 = vld [vmem:[%s210 + $0x40] sm:$0xff]
        %v251 = vld [vmem:[%s210 + $0x48] sm:$0xff]
        %v252 = vld [vmem:[%s210 + $0x50] sm:$0xff]
        %v253 = vld [vmem:[%s210 + $0x58] sm:$0xff]
        %v254 = vld [vmem:[%s210 + $0x60] sm:$0xff]
        %v255 = vld [vmem:[%s210 + $0x68] sm:$0xff]
        %v256 = vld [vmem:[%s210 + $0x70] sm:$0xff]
        %v257 = vld [vmem:[%s210 + $0x78] sm:$0xff]
        %v262 = vunpack.c.l.b16 %v238
        %v263 = vunpack.c.l.b16 %v239
        %v264 = vunpack.c.l.b16 %v240
        %v265 = vunpack.c.l.b16 %v241
        %v266 = vpack.c.b16 %v263, %v262
        %v267 = vpack.c.b16 %v265, %v264
        %v286 = vunpack.c.l.b16 %v242
        %v287 = vunpack.c.h.b16 %v242
        %v288 = vunpack.c.l.b16 %v243
        %v289 = vunpack.c.h.b16 %v243
        %v290 = vunpack.c.l.b16 %v244
        %v291 = vunpack.c.h.b16 %v244
        %v292 = vunpack.c.l.b16 %v245
        %v293 = vunpack.c.h.b16 %v245
        %v294 = vunpack.c.l.b16 %v246
        %v295 = vunpack.c.h.b16 %v246
        %v296 = vunpack.c.l.b16 %v247
        %v297 = vunpack.c.h.b16 %v247
        %v298 = vunpack.c.l.b16 %v248
        %v299 = vunpack.c.h.b16 %v248
        %v300 = vunpack.c.l.b16 %v249
        %v301 = vunpack.c.h.b16 %v249
        %v302 = vunpack.c.l.b16 %v250
        %v303 = vunpack.c.h.b16 %v250
        %v304 = vunpack.c.l.b16 %v251
        %v305 = vunpack.c.h.b16 %v251
        %v306 = vunpack.c.l.b16 %v252
        %v307 = vunpack.c.h.b16 %v252
        %v308 = vunpack.c.l.b16 %v253
        %v309 = vunpack.c.h.b16 %v253
        %v310 = vunpack.c.l.b16 %v254
        %v311 = vunpack.c.h.b16 %v254
        %v312 = vunpack.c.l.b16 %v255
        %v313 = vunpack.c.h.b16 %v255
        %v314 = vunpack.c.l.b16 %v256
        %v315 = vunpack.c.h.b16 %v256
        %v316 = vunpack.c.l.b16 %v257
        %v317 = vunpack.c.h.b16 %v257
        %v318 = vpack.c.b16 %v288, %v286
        %v319 = vpack.c.b16 %v289, %v287
        %v320 = vpack.c.b16 %v292, %v290
        %v321 = vpack.c.b16 %v293, %v291
        %v322 = vpack.c.b16 %v296, %v294
        %v323 = vpack.c.b16 %v297, %v295
        %v324 = vpack.c.b16 %v300, %v298
        %v325 = vpack.c.b16 %v301, %v299
        %v326 = vpack.c.b16 %v304, %v302
        %v327 = vpack.c.b16 %v305, %v303
        %v328 = vpack.c.b16 %v308, %v306
        %v329 = vpack.c.b16 %v309, %v307
        %v330 = vpack.c.b16 %v312, %v310
        %v331 = vpack.c.b16 %v313, %v311
        %v332 = vpack.c.b16 %v316, %v314
        %v333 = vpack.c.b16 %v317, %v315
        %350 = vmatpush.bf16.msra.mxu0 %v332
        %351 = vmatpush.bf16.msra.mxu0 %v330
        %352 = vmatpush.bf16.msra.mxu0 %v328
        %353 = vmatpush.bf16.msra.mxu0 %v326
        %354 = vmatpush.bf16.msra.mxu0 %v324
        %355 = vmatpush.bf16.msra.mxu0 %v322
        %356 = vmatpush.bf16.msra.mxu0 %v320
        %357 = vmatpush.bf16.msra.mxu0 %v318
        %358 = vmatmul.bf16.gmra.mxu0 %v266
        %v359 = vpop.f32.mrf.mxu0
        %v360 = vadd.f32 0.0, %v359
        %v361 = vpop.f32.mrf.mxu0
        %v362 = vadd.f32 0.0, %v361
        %363 = vmatmul.bf16.gmra.mxu0 %v267
        %v364 = vpop.f32.mrf.mxu0
        %v365 = vadd.f32 0.0, %v364
        %v366 = vpop.f32.mrf.mxu0
        %v367 = vadd.f32 0.0, %v366
        %368 = vdwg.mxu0
        %369 = vmatpush.bf16.msra.mxu0 %v333
        %370 = vmatpush.bf16.msra.mxu0 %v331
        %371 = vmatpush.bf16.msra.mxu0 %v329
        %372 = vmatpush.bf16.msra.mxu0 %v327
        %373 = vmatpush.bf16.msra.mxu0 %v325
        %374 = vmatpush.bf16.msra.mxu0 %v323
        %375 = vmatpush.bf16.msra.mxu0 %v321
        %376 = vmatpush.bf16.msra.mxu0 %v319
        %377 = vmatmul.bf16.gmra.mxu0 %v266
        %v378 = vpop.f32.mrf.mxu0
        %v379 = vadd.f32 0.0, %v378
        %v380 = vpop.f32.mrf.mxu0
        %v381 = vadd.f32 0.0, %v380
        %382 = vmatmul.bf16.gmra.mxu0 %v267
        %v383 = vpop.f32.mrf.mxu0
        %v384 = vadd.f32 0.0, %v383
        %v385 = vpop.f32.mrf.mxu0
        %v386 = vadd.f32 0.0, %v385
        %387 = vdwg.mxu0
        %v388 = vld [vmem:[%s2] sm:$0xff]
        %v389 = vld [vmem:[%s2 + $0x8] sm:$0xff]
        %v390 = vld [vmem:[%s2 + $0x10] sm:$0xff]
        %v391 = vld [vmem:[%s2 + $0x18] sm:$0xff]
        %393 = vset.pattern.permute.xlu0 0
        %394 = vperm.xlu0 %393, %v388
        %v395 = vpop.permute.xlu0 %394
        %398 = vset.pattern.permute.xlu0 0
        %399 = vperm.xlu0 %398, %v389
        %v400 = vpop.permute.xlu0 %399
        %403 = vset.pattern.permute.xlu0 0
        %404 = vperm.xlu0 %403, %v390
        %v405 = vpop.permute.xlu0 %404
        %408 = vset.pattern.permute.xlu0 0
        %409 = vperm.xlu0 %408, %v391
        %v410 = vpop.permute.xlu0 %409
        %v412 = vmul.f32 %v360, %v395
        %v413 = vmul.f32 %v379, %v395
        %v414 = vmul.f32 %v362, %v400
        %v415 = vmul.f32 %v381, %v400
        %v416 = vmul.f32 %v365, %v405
        %v417 = vmul.f32 %v384, %v405
        %v418 = vmul.f32 %v367, %v410
        %v419 = vmul.f32 %v386, %v410
        %v420 = vld [vmem:[%s3] sm:$0xff]
        %v421 = vld [vmem:[%s3 + $0x8] sm:$0xff]
        %v422 = vld [vmem:[%s3 + $0x10] sm:$0xff]
        %v423 = vld [vmem:[%s3 + $0x18] sm:$0xff]
        %425 = vset.pattern.permute.xlu0 0
        %426 = vperm.xlu0 %425, %v420
        %v427 = vpop.permute.xlu0 %426
        %430 = vset.pattern.permute.xlu0 0
        %431 = vperm.xlu0 %430, %v421
        %v432 = vpop.permute.xlu0 %431
        %435 = vset.pattern.permute.xlu0 0
        %436 = vperm.xlu0 %435, %v422
        %v437 = vpop.permute.xlu0 %436
        %440 = vset.pattern.permute.xlu0 0
        %441 = vperm.xlu0 %440, %v423
        %v442 = vpop.permute.xlu0 %441
        %v444 = vadd.f32 %v412, %v427
        %v445 = vadd.f32 %v413, %v427
        %v446 = vadd.f32 %v414, %v432
        %v447 = vadd.f32 %v415, %v432
        %v448 = vadd.f32 %v416, %v437
        %v449 = vadd.f32 %v417, %v437
        %v450 = vadd.f32 %v418, %v442
        %v451 = vadd.f32 %v419, %v442
        %v452 = vmax.f32 %v444, 0.0
        %v453 = vmax.f32 %v445, 0.0
        %v454 = vmax.f32 %v446, 0.0
        %v455 = vmax.f32 %v447, 0.0
        %v456 = vmax.f32 %v448, 0.0
        %v457 = vmax.f32 %v449, 0.0
        %v458 = vmax.f32 %v450, 0.0
        %v459 = vmax.f32 %v451, 0.0
        %460 = vst [vmem:[%s235] sm:$0xff] %v452
        %461 = vst [vmem:[%s235 + $0x8] sm:$0xff] %v453
        %462 = vst [vmem:[%s235 + $0x10] sm:$0xff] %v454
        %463 = vst [vmem:[%s235 + $0x18] sm:$0xff] %v455
        %464 = vst [vmem:[%s235 + $0x20] sm:$0xff] %v456
        %465 = vst [vmem:[%s235 + $0x28] sm:$0xff] %v457
        %466 = vst [vmem:[%s235 + $0x30] sm:$0xff] %v458
        %467 = vst [vmem:[%s235 + $0x38] sm:$0xff] %v459
        %s468 = sand.u32 %s134, 1
        %s469 = scalar_lea.sflag [#allocation4], %s468
        %s470 = sand.u32 %s134, 1
        %s471 = smul.addr %s470, 64
        %s472 = scalar_lea.vmem [#allocation5], %s471
        // Predicated region
        $region41: #{tpu_custom_call.1} parent=35 // pred_check
          %p473 = pneg %p144
        $region42: #{tpu_custom_call.1} parent=35 // pred_check_branch
          %475 = sbr.rel (%p473) target = $region44
        $region43: #{tpu_custom_call.1} parent=35 // pred_region
          %s476 = smul.u32 2, %s26
          %478 = vsyncadd %s469, 0
          %s479 = smul.addr %s25, 8
          %s480 = sadd.s32 %s476, %s479
          %s481 = smul.addr %s480, 8
          %s482 = scalar_lea.hbm %s4, %s481
          %s483 = sshll.u32 %s472, 4
          %s484 = int_to_ptr.vmem [resolvable:$true] %s483
          %s485 = sshll.u32 %s482, 4
          %s486 = int_to_ptr.hbm [resolvable:$true] %s485
          %491 = dma.vmem_to_hbm [thread:$0]  %s484, 1024, %s486, %s469, 256, 256, 16
        $region44: #{tpu_custom_call.1} parent=35 // pred_fallthru
          _
      $region36: #{tpu_custom_call.1} parent=5 // pred_fallthru
        _
      %p492 = scmp.le.s32.totalorder 2, %s16
      // Predicated region
      $region45: #{tpu_custom_call.1} parent=5 // pred_check
        %p493 = pneg %p492
      $region46: #{tpu_custom_call.1} parent=5 // pred_check_branch
        %495 = sbr.rel (%p493) target = $region48
      $region47: #{tpu_custom_call.1} parent=5 // pred_region
        %s496 = ssub.s32 %s16, 2
        // Predicated region
        $region49: #{tpu_custom_call.1} parent=47 // pred_check
          %p497 = pneg %p150
        $region50: #{tpu_custom_call.1} parent=47 // pred_check_branch
          %499 = sbr.rel (%p497) target = $region52
        $region51: #{tpu_custom_call.1} parent=47 // pred_region
          %s500 = sand.u32 %s135, 1
          %s501 = scalar_lea.sflag [#allocation4], %s500
          %s502 = sand.u32 %s135, 1
          %s503 = smul.addr %s502, 64
          %s504 = scalar_lea.vmem [#allocation5], %s503
          %506 = dma.done %s501, 1024
        $region52: #{tpu_custom_call.1} parent=47 // pred_fallthru
          _
      $region48: #{tpu_custom_call.1} parent=5 // pred_fallthru
        _
    $region6: #{tpu_custom_call.1} parent=1 // loop_footer
      %s20 = sadd.s32 1, %s16
    $region7: #{tpu_custom_call.1} parent=1 // loop_footer_branch
      %15 = sbr.rel target = $region3
    $region8: #{tpu_custom_call.1} parent=1 // loop_exit
      _
    %507 = vsyncpa [#allocation3], 1
    %s508 = scalar_lea.sflag [#allocation3], 1
    %509 = vsyncpa %s508, 1
    %510 = vsyncpa [#allocation4], 1
    %s511 = scalar_lea.sflag [#allocation4], 1
    %512 = vsyncpa %s511, 1

</llo_original>
